<compile_context>
chip_gen: v7x
topology: tpu7x:2x2x1
jax: 0.10.0
libtpu: 0.0.40
codegen_flags: <defaults>
</compile_context>

<pallas_src>
import functools

import jax
import jax.numpy as jnp
from jax import lax
from jax.experimental import pallas as pl
from jax.experimental.pallas import tpu as pltpu  # noqa: F401  (TPU backend)


_UNROLL_STEPS = 4                      # static unroll up to here, fori beyond
_VMEM_BUDGET_BYTES = 48 * 1024 * 1024  # headroom under v7x's 64 MiB / TC


# ------------------------------ fused kernel --------------------------------


def _tent_fused_kernel(x_ref, w_ref, b_ref,
                       logits_ref, w_out_ref, b_out_ref, *, lr, steps):
    """All `steps` Tent adaptation steps on a linear model, fully in VMEM.

    x: [N, D] (matmul dtype)   W: [C, D] f32 master   b: [C, 1] f32
    Per step (class-major, logits_t = [C, N]):
      logits_t = W @ x.T + b
      H_n        = -sum_c p_cn * log p_cn
      dL/dz_cn   = -(1/N) * p_cn * (log p_cn + H_n)     (L = mean_n H_n)
      dW = dlogits_t @ x ; db = sum_N dlogits_t
      W -= lr*dW ; b -= lr*db                           (SGD, no momentum)
    Writes the logits of the LAST step (computed before that step's update).
    """
    x = x_ref[...]                        # [N, D], single VMEM read
    w = w_ref[...]                        # [C, D] f32 master copy
    b = b_ref[...]                        # [C, 1] f32
    n = x.shape[0]
    c = w.shape[0]
    mm_dtype = x.dtype                    # bf16 (default) or f32
    inv_n = jnp.float32(1.0 / n)
    lr_f = jnp.float32(lr)

    def adapt_step(w_f32, b_col):
        # ---- forward, class-major: contract D of both operands -> [C, N] ----
        logits_t = lax.dot_general(
            w_f32.astype(mm_dtype), x,
            dimension_numbers=(((1,), (1,)), ((), ())),
            preferred_element_type=jnp.float32) + b_col            # [C, N]

        # ---- softmax-entropy gradient (single exp, sublane reductions) ----
        zs = logits_t - jnp.max(logits_t, axis=0, keepdims=True)
        e = jnp.exp(zs)                                            # one EUP exp
        s = jnp.sum(e, axis=0, keepdims=True)                      # [1, N]
        logp = zs - jnp.log(s)
        p = e / s
        ent = -jnp.sum(p * logp, axis=0, keepdims=True)            # [1, N]
        dlogits_t = -(p * (logp + ent)) * inv_n                    # [C, N]

        # ---- backward: contract N of dlogits_t and x (no transposes) ----
        dw = lax.dot_general(
            dlogits_t.astype(mm_dtype), x,
            dimension_numbers=(((1,), (0,)), ((), ())),
            preferred_element_type=jnp.float32)                    # [C, D]
        db = jnp.sum(dlogits_t, axis=1, keepdims=True)             # [C, 1]

        # ---- SGD update on f32 master params ----
        return w_f32 - lr_f * dw, b_col - lr_f * db, logits_t

    if steps <= _UNROLL_STEPS:
        logits_t = None
        for _ in range(steps):            # static unroll; steps is tiny
            w, b, logits_t = adapt_step(w, b)
    else:
        def body(_, carry):
            w_c, b_c, _unused_logits = carry
            return adapt_step(w_c, b_c)
        w, b, logits_t = lax.fori_loop(
            0, steps, body, (w, b, jnp.zeros((c, n), jnp.float32)))

    logits_ref[...] = logits_t            # last-step logits, pre-update [C, N]
    w_out_ref[...] = w                    # aliased in place with the W input
    b_out_ref[...] = b                    # aliased in place with the b input


# ------------------------------ Tent wrapper --------------------------------


def tent_forward(x, params, *, lr=1e-3, steps=1, episodic=False,
                 initial_params=None, matmul_dtype=jnp.bfloat16):
    """Pallas version of Tent.forward.

    params = (W [C, D] f32, b [C, 1] f32).  Returns (outputs, updated_params);
    `outputs` are [N, C] logits from the last adaptation step (computed with
    the params *before* that step's update), matching forward_and_adapt.
    `matmul_dtype` selects the MXU operand dtype (bf16 default, f32 exact).
    """
    assert steps > 0, "tent requires >= 1 step(s) to forward and update"
    w, b = params
    if episodic:
        # reset() — restore the saved snapshot (copy_model_and_optimizer)
        assert initial_params is not None
        w, b = initial_params

    n = x.shape[0]
    x_flat = x.reshape(n, -1)             # NCHW -> [N, C*H*W] row-major
    c, d = w.shape

    mm_bytes = jnp.dtype(matmul_dtype).itemsize
    approx_vmem = (n * d * mm_bytes            # x, resident (no grid)
                   + 2 * (c * d * 4 + c * 4)   # W, b in + aliased out
                   + c * n * 4                 # logits out
                   + c * d * 4)                # live dW values
    if approx_vmem > _VMEM_BUDGET_BYTES:
        # TODO(synk): N-gridded, pipelined variant for realistic batch sizes:
        # grid=(steps, N//TN), x auto-pipelined via BlockSpec, W/b resident in
        # VMEM scratch, dW accumulated per tile, SGD update under
        # pl.when(last tile); split N across v7x's two TensorCores.
        raise NotImplementedError(
            f"~{approx_vmem / 2**20:.1f} MiB resident exceeds the no-grid "
            f"VMEM budget ({_VMEM_BUDGET_BYTES / 2**20:.0f} MiB)")

    x_in = x_flat.astype(matmul_dtype)    # bf16 -> half the x DMA bytes

    # advisory cost hint so XLA can overlap this tiny kernel with other work
    cost = pl.CostEstimate(
        flops=int(steps * 4 * n * d * c),                 # fwd + bwd matmuls
        transcendentals=int(steps * (n * c + 2 * n)),     # exp + log + recip
        bytes_accessed=int(n * d * mm_bytes + 4 * (2 * (c * d + c) + c * n)),
    )

    logits_cn, w_new, b_new = pl.pallas_call(
        functools.partial(_tent_fused_kernel, lr=lr, steps=steps),
        out_shape=(
            jax.ShapeDtypeStruct((c, n), jnp.float32),    # last-step logits
            jax.ShapeDtypeStruct((c, d), jnp.float32),    # updated W
            jax.ShapeDtypeStruct((c, 1), jnp.float32),    # updated b
        ),
        # inputs: (x, W, b) ; outputs: (logits, W, b) -> update params in place
        input_output_aliases={1: 1, 2: 2},
        cost_estimate=cost,
        # no grid: whole problem resident in VMEM (guarded above); tiling
        # these tiny arrays would only add per-step overhead.
    )(x_in, w, b)

    # single user-facing transpose to [N, C], outside the kernel / step loop
    outputs = logits_cn.T

    # TODO(synk): optimizer state copy/restore beyond the param snapshot
    # (e.g. SGD momentum buffers) is host-side bookkeeping, not kernel work.
    return outputs, (w_new, b_new)


# ------------------------------ reference -----------------------------------


def _ref_tent(x_flat, w, b, lr, steps):
    """Pure-JAX autograd reference for `steps` Tent adaptation steps (f32)."""
    logits = None
    for _ in range(steps):
        def loss_fn(w_, b_):
            z = x_flat @ w_.T + b_.T          # b_ is [C, 1]
            logp = jax.nn.log_softmax(z, axis=1)
            p = jax.nn.softmax(z, axis=1)
            return -(p * logp).sum(1).mean(0), z

        (_, logits), grads = jax.value_and_grad(
            loss_fn, argnums=(0, 1), has_aux=True)(w, b)
        w = w - lr * grads[0]
        b = b - lr * grads[1]
    return logits, w, b


# -------------------------------- main ---------------------------------------


if __name__ == "__main__":
    key = jax.random.PRNGKey(0)
    N, C, H, W = 2, 4, 16, 16
    NUM_CLASSES = 8
    D = C * H * W
    LR = 1e-3

    kx, kw, kb = jax.random.split(key, 3)
    x = jax.random.normal(kx, (N, C, H, W), jnp.float32)
    w0 = 0.02 * jax.random.normal(kw, (NUM_CLASSES, D), jnp.float32)
    b0 = 0.02 * jax.random.normal(kb, (NUM_CLASSES, 1), jnp.float32)
    x_flat = x.reshape(N, -1)

    # --- exact f32 MXU path, steps=1 (Tent default): tight tolerances ---
    out1, (w1, b1) = tent_forward(x, (w0, b0), lr=LR, steps=1,
                                  matmul_dtype=jnp.float32)
    jax.block_until_ready((out1, w1, b1))
    r_logits1, r_w1, r_b1 = _ref_tent(x_flat, w0, b0, LR, 1)
    assert jnp.allclose(out1, r_logits1, rtol=1e-4, atol=1e-5), "logits mismatch"
    assert jnp.allclose(w1, r_w1, rtol=1e-4, atol=1e-6), "weight update mismatch"
    assert jnp.allclose(b1, r_b1, rtol=1e-4, atol=1e-6), "bias update mismatch"

    # --- f32 path, steps=2: in-kernel multi-step (static unroll) ---
    out2, (w2, b2) = tent_forward(x, (w0, b0), lr=LR, steps=2,
                                  matmul_dtype=jnp.float32)
    jax.block_until_ready((out2, w2, b2))
    r_logits2, r_w2, r_b2 = _ref_tent(x_flat, w0, b0, LR, 2)
    assert jnp.allclose(out2, r_logits2, rtol=1e-4, atol=1e-5), "logits mismatch (2 steps)"
    assert jnp.allclose(w2, r_w2, rtol=1e-4, atol=1e-6), "weight update mismatch (2 steps)"
    assert jnp.allclose(b2, r_b2, rtol=1e-4, atol=1e-6), "bias update mismatch (2 steps)"

    # --- f32 path, steps=5: exercises the in-kernel lax.fori_loop ---
    out5, (w5, b5) = tent_forward(x, (w0, b0), lr=LR, steps=5,
                                  matmul_dtype=jnp.float32)
    jax.block_until_ready((out5, w5, b5))
    r_logits5, r_w5, r_b5 = _ref_tent(x_flat, w0, b0, LR, 5)
    assert jnp.allclose(out5, r_logits5, rtol=1e-4, atol=1e-5), "logits mismatch (5 steps)"
    assert jnp.allclose(w5, r_w5, rtol=1e-4, atol=1e-5), "weight update mismatch (5 steps)"
    assert jnp.allclose(b5, r_b5, rtol=1e-4, atol=1e-5), "bias update mismatch (5 steps)"

    # --- bf16 MXU fast path (default): loose tolerances vs f32 autograd ---
    outb, (wb, bb) = tent_forward(x, (w0, b0), lr=LR, steps=1)
    jax.block_until_ready((outb, wb, bb))
    assert jnp.allclose(outb, r_logits1, rtol=2e-2, atol=5e-2), "bf16 logits mismatch"
    assert jnp.allclose(wb, r_w1, rtol=1e-3, atol=1e-5), "bf16 weight update mismatch"
    assert jnp.allclose(bb, r_b1, rtol=1e-3, atol=1e-5), "bf16 bias update mismatch"

    print("KERNEL_OK")
</pallas_src>

<mosaic_0001>
module attributes {stable_mosaic.version = 11 : i64} {
  func.func @_tent_fused_kernel(%arg0: memref<2x1024xf32, #tpu.memory_space<vmem>>, %arg1: memref<8x1024xf32, #tpu.memory_space<vmem>>, %arg2: memref<8x1xf32, #tpu.memory_space<vmem>>, %arg3: memref<8x2xf32, #tpu.memory_space<vmem>>, %arg4: memref<8x1024xf32, #tpu.memory_space<vmem>>, %arg5: memref<8x1xf32, #tpu.memory_space<vmem>>) attributes {dimension_semantics = [], scalar_prefetch = 0 : i64, scratch_operands = 0 : i64, tpu.core_type = #tpu.core_type<tc>} {
    %c0 = arith.constant 0 : index
    %c0_0 = arith.constant 0 : index
    %0 = vector.load %arg0[%c0, %c0_0] : memref<2x1024xf32, #tpu.memory_space<vmem>>, vector<2x1024xf32>
    %c0_1 = arith.constant 0 : index
    %c0_2 = arith.constant 0 : index
    %1 = vector.load %arg1[%c0_1, %c0_2] : memref<8x1024xf32, #tpu.memory_space<vmem>>, vector<8x1024xf32>
    %c0_3 = arith.constant 0 : index
    %c0_4 = arith.constant 0 : index
    %2 = vector.load %arg2[%c0_3, %c0_4] : memref<8x1xf32, #tpu.memory_space<vmem>>, vector<8x1xf32>
    %cst = arith.constant dense<0.000000e+00> : vector<8x2xf32>
    %3 = tpu.matmul %1, %0, %cst {dimension_numbers = #tpu.dot_dimension_numbers<[1], [1], [0], [0], [0, 0, 1, 0], [], []>} : vector<8x1024xf32>, vector<2x1024xf32>, vector<8x2xf32> -> vector<8x2xf32>
    %4 = vector.broadcast %2 : vector<8x1xf32> to vector<8x2xf32>
    %5 = arith.addf %3, %4 : vector<8x2xf32>
    %cst_5 = arith.constant dense<0xFF800000> : vector<2xf32>
    %6 = vector.multi_reduction <maximumf>, %5, %cst_5 [0] : vector<8x2xf32> to vector<2xf32>
    %7 = vector.shape_cast %6 : vector<2xf32> to vector<1x2xf32>
    %8 = vector.broadcast %7 : vector<1x2xf32> to vector<8x2xf32>
    %9 = arith.subf %5, %8 : vector<8x2xf32>
    %10 = math.exp %9 : vector<8x2xf32>
    %cst_6 = arith.constant dense<0.000000e+00> : vector<2xf32>
    %11 = vector.multi_reduction <add>, %10, %cst_6 [0] : vector<8x2xf32> to vector<2xf32>
    %12 = vector.shape_cast %11 : vector<2xf32> to vector<1x2xf32>
    %13 = math.log %12 : vector<1x2xf32>
    %14 = vector.broadcast %13 : vector<1x2xf32> to vector<8x2xf32>
    %15 = arith.subf %9, %14 : vector<8x2xf32>
    %16 = vector.broadcast %12 : vector<1x2xf32> to vector<8x2xf32>
    %17 = arith.divf %10, %16 : vector<8x2xf32>
    %18 = arith.mulf %17, %15 : vector<8x2xf32>
    %cst_7 = arith.constant dense<0.000000e+00> : vector<2xf32>
    %19 = vector.multi_reduction <add>, %18, %cst_7 [0] : vector<8x2xf32> to vector<2xf32>
    %20 = vector.shape_cast %19 : vector<2xf32> to vector<1x2xf32>
    %cst_8 = arith.constant 0.000000e+00 : f32
    %21 = vector.broadcast %cst_8 : f32 to vector<1x2xf32>
    %22 = arith.subf %21, %20 : vector<1x2xf32>
    %23 = vector.broadcast %22 : vector<1x2xf32> to vector<8x2xf32>
    %24 = arith.addf %15, %23 : vector<8x2xf32>
    %25 = arith.mulf %17, %24 : vector<8x2xf32>
    %cst_9 = arith.constant 0.000000e+00 : f32
    %26 = vector.broadcast %cst_9 : f32 to vector<8x2xf32>
    %27 = arith.subf %26, %25 : vector<8x2xf32>
    %cst_10 = arith.constant 5.000000e-01 : f32
    %28 = vector.broadcast %cst_10 : f32 to vector<8x2xf32>
    %29 = arith.mulf %27, %28 : vector<8x2xf32>
    %cst_11 = arith.constant dense<0.000000e+00> : vector<8x1024xf32>
    %30 = tpu.matmul %29, %0, %cst_11 {dimension_numbers = #tpu.dot_dimension_numbers<[1], [0], [0], [1], [0, 0, 1, 1], [], []>} : vector<8x2xf32>, vector<2x1024xf32>, vector<8x1024xf32> -> vector<8x1024xf32>
    %cst_12 = arith.constant dense<0.000000e+00> : vector<8xf32>
    %31 = vector.multi_reduction <add>, %29, %cst_12 [1] : vector<8x2xf32> to vector<8xf32>
    %32 = vector.shape_cast %31 : vector<8xf32> to vector<8x1xf32>
    %cst_13 = arith.constant 1.000000e-03 : f32
    %33 = vector.broadcast %cst_13 : f32 to vector<8x1024xf32>
    %34 = arith.mulf %33, %30 : vector<8x1024xf32>
    %35 = arith.subf %1, %34 : vector<8x1024xf32>
    %cst_14 = arith.constant 1.000000e-03 : f32
    %36 = vector.broadcast %cst_14 : f32 to vector<8x1xf32>
    %37 = arith.mulf %36, %32 : vector<8x1xf32>
    %38 = arith.subf %2, %37 : vector<8x1xf32>
    %c0_15 = arith.constant 0 : index
    %c0_16 = arith.constant 0 : index
    %39 = vector.load %arg3[%c0_15, %c0_16] : memref<8x2xf32, #tpu.memory_space<vmem>>, vector<8x2xf32>
    tpu.vector_store %arg3[%c0_15, %c0_16], %5 {strides = array<i32>} : memref<8x2xf32, #tpu.memory_space<vmem>>, vector<8x2xf32>,
    %c0_17 = arith.constant 0 : index
    %c0_18 = arith.constant 0 : index
    %40 = vector.load %arg4[%c0_17, %c0_18] : memref<8x1024xf32, #tpu.memory_space<vmem>>, vector<8x1024xf32>
    tpu.vector_store %arg4[%c0_17, %c0_18], %35 {strides = array<i32>} : memref<8x1024xf32, #tpu.memory_space<vmem>>, vector<8x1024xf32>,
    %c0_19 = arith.constant 0 : index
    %c0_20 = arith.constant 0 : index
    %41 = vector.load %arg5[%c0_19, %c0_20] : memref<8x1xf32, #tpu.memory_space<vmem>>, vector<8x1xf32>
    tpu.vector_store %arg5[%c0_19, %c0_20], %38 {strides = array<i32>} : memref<8x1xf32, #tpu.memory_space<vmem>>, vector<8x1xf32>,
    return
  }
}

</mosaic_0001>

<llo_original>
// kernel: tpu_custom_call.1
$region0: #{tpu_custom_call.1}
  #allocation0 [shape = 'u32[]', space=smem, size = 0x4, offset = 0x4, fixed_abs, tag = 'smem constant byte address 0x4 - core index']
  #allocation1 [shape = 'u32[144,128]{1,0:T(1,128)}', space=vmem, size = 0x12000, scoped, tag = 'internal scratch']
  %s0 = inlined_call_operand.vmem [shape: f32[2,1024], index: 0, kind: input, shape index: {}]
  %s1 = inlined_call_operand.vmem [shape: f32[8,1024], index: 1, kind: input, shape index: {}, may-alias: {1,4}]
  %s2 = inlined_call_operand.vmem [shape: f32[8,1], index: 2, kind: input, shape index: {}, may-alias: {2,5}]
  %s3 = inlined_call_operand.vmem [shape: f32[8,2], index: 3, kind: output, shape index: {0}]
  %s4 = inlined_call_operand.vmem [shape: f32[8,1024], index: 4, kind: output, shape index: {1}, may-alias: {1,4}]
  %s5 = inlined_call_operand.vmem [shape: f32[8,1], index: 5, kind: output, shape index: {2}, may-alias: {2,5}]
  %6 = xla_tuple %s3, %s4, %s5
  %s7 = sld [smem:[#allocation0]]
  $region38: #{tpu_custom_call.1} parent=0
    _
  %s9 = ssub.s32 1, %s7
  %s10 = scalar_select 0, %s9, %s7
  // Predicated region
  $region2: #{tpu_custom_call.1} parent=0 // pred_check
    _
  $region3: #{tpu_custom_call.1} parent=0 // pred_check_branch
    %12 = sbr.rel (0) target = $region5
  $region4: #{tpu_custom_call.1} parent=0 // pred_region
    _
  $region5: #{tpu_custom_call.1} parent=0 // pred_fallthru
    _
  // Predicated region
  $region6: #{tpu_custom_call.1} parent=0 // pred_check
    _
  $region7: #{tpu_custom_call.1} parent=0 // pred_check_branch
    %14 = sbr.rel (0) target = $region9
  $region8: #{tpu_custom_call.1} parent=0 // pred_region
    _
  $region9: #{tpu_custom_call.1} parent=0 // pred_fallthru
    _
  // Predicated region
  $region10: #{tpu_custom_call.1} parent=0 // pred_check
    _
  $region11: #{tpu_custom_call.1} parent=0 // pred_check_branch
    %16 = sbr.rel (0) target = $region13
  $region12: #{tpu_custom_call.1} parent=0 // pred_region
    _
  $region13: #{tpu_custom_call.1} parent=0 // pred_fallthru
    _
  %v17 = vld [vmem:[%s0] sm:$0xff]
  %v18 = vld [vmem:[%s0 + $0x8] sm:$0xff]
  %v19 = vld [vmem:[%s1] sm:$0xff]
  %v20 = vld [vmem:[%s1 + $0x8] sm:$0xff]
  %v21 = vld [vmem:[%s1 + $0x10] sm:$0xff]
  %v22 = vld [vmem:[%s1 + $0x18] sm:$0xff]
  %v23 = vld [vmem:[%s1 + $0x20] sm:$0xff]
  %v24 = vld [vmem:[%s1 + $0x28] sm:$0xff]
  %v25 = vld [vmem:[%s1 + $0x30] sm:$0xff]
  %v26 = vld [vmem:[%s1 + $0x38] sm:$0xff]
  %v27 = vld [vmem:[%s2] sm:$0xff]
  %29 = vset.pattern.permute.xlu0 0
  %30 = vperm.xlu0 %29, %v27
  %v31 = vpop.permute.xlu0 %30
  %v35 = vcombine.high %v17, %v17
  %v37 = vunpack.c.l.s4 1983009808
  %v38 = vunpack.c.0.s8 %v37
  %v39 = vlaneseq
  %v40 = vshrl.u32 %v39, 7
  %v41 = vsub.s32 %v38, %v40
  %v42 = vrot.slane %v17, %v41
  %v44 = vunpack.c.l.s4 1983009808
  %v45 = vunpack.c.0.s8 %v44
  %v46 = vlaneseq
  %v47 = vshrl.u32 %v46, 7
  %v48 = vsub.s32 %v45, %v47
  %v49 = vrot.slane %v35, %v48
  %v50 = vcombine.high %v42, %v42
  %v51 = vcombine.high %v49, %v49
  %v52 = vcombine.high %v18, %v18
  %v54 = vunpack.c.l.s4 1983009808
  %v55 = vunpack.c.0.s8 %v54
  %v56 = vlaneseq
  %v57 = vshrl.u32 %v56, 7
  %v58 = vsub.s32 %v55, %v57
  %v59 = vrot.slane %v18, %v58
  %v61 = vunpack.c.l.s4 1983009808
  %v62 = vunpack.c.0.s8 %v61
  %v63 = vlaneseq
  %v64 = vshrl.u32 %v63, 7
  %v65 = vsub.s32 %v62, %v64
  %v66 = vrot.slane %v52, %v65
  %v67 = vcombine.high %v59, %v59
  %v68 = vcombine.high %v66, %v66
  %77 = vmatprep.subr.mxu0 %v50
  %78 = vmatpush1.xpose.msra.mxu0 %v42
  %79 = vmatprep.subr.mxu0 0.0
  %80 = vmatpush1.xpose.msra.mxu0 0.0
  %81 = vmatprep.subr.mxu0 0.0
  %82 = vmatpush1.xpose.msra.mxu0 0.0
  %83 = vmatprep.subr.mxu0 0.0
  %84 = vmatpush1.xpose.msra.mxu0 0.0
  %85 = vmatprep.subr.mxu0 0.0
  %86 = vmatpush1.xpose.msra.mxu0 0.0
  %87 = vmatprep.subr.mxu0 0.0
  %88 = vmatpush1.xpose.msra.mxu0 0.0
  %89 = vmatprep.subr.mxu0 0.0
  %90 = vmatpush1.xpose.msra.mxu0 0.0
  %91 = vmatprep.subr.mxu0 0.0
  %92 = vmatpush1.xpose.msra.mxu0 0.0
  %93 = vmatprep.subr.mxu0 0.0
  %94 = vmatpush1.xpose.msra.mxu0 0.0
  %95 = vmatprep.subr.mxu0 0.0
  %96 = vmatpush1.xpose.msra.mxu0 0.0
  %97 = vmatprep.subr.mxu0 0.0
  %98 = vmatpush1.xpose.msra.mxu0 0.0
  %99 = vmatprep.subr.mxu0 0.0
  %100 = vmatpush1.xpose.msra.mxu0 0.0
  %101 = vmatprep.subr.mxu0 0.0
  %102 = vmatpush1.xpose.msra.mxu0 0.0
  %103 = vmatprep.subr.mxu0 0.0
  %104 = vmatpush1.xpose.msra.mxu0 0.0
  %105 = vmatprep.subr.mxu0 0.0
  %106 = vmatpush1.xpose.msra.mxu0 0.0
  %107 = vmatprep.subr.mxu0 0.0
  %108 = vmatpush1.xpose.msra.mxu0 0.0
  %109 = vmatprep.subr.mxu0 0.0
  %110 = vmatpush1.xpose.msra.mxu0 0.0
  %111 = vmatprep.subr.mxu0 0.0
  %112 = vmatpush1.xpose.msra.mxu0 0.0
  %113 = vmatprep.subr.mxu0 0.0
  %114 = vmatpush1.xpose.msra.mxu0 0.0
  %115 = vmatprep.subr.mxu0 0.0
  %116 = vmatpush1.xpose.msra.mxu0 0.0
  %117 = vmatprep.subr.mxu0 0.0
  %118 = vmatpush1.xpose.msra.mxu0 0.0
  %119 = vmatprep.subr.mxu0 0.0
  %120 = vmatpush1.xpose.msra.mxu0 0.0
  %121 = vmatprep.subr.mxu0 0.0
  %122 = vmatpush1.xpose.msra.mxu0 0.0
  %123 = vmatprep.subr.mxu0 0.0
  %124 = vmatpush1.xpose.msra.mxu0 0.0
  %125 = vmatprep.subr.mxu0 0.0
  %126 = vmatpush1.xpose.msra.mxu0 0.0
  %127 = vmatprep.subr.mxu0 0.0
  %128 = vmatpush1.xpose.msra.mxu0 0.0
  %129 = vmatprep.subr.mxu0 0.0
  %130 = vmatpush1.xpose.msra.mxu0 0.0
  %131 = vmatprep.subr.mxu0 0.0
  %132 = vmatpush1.xpose.msra.mxu0 0.0
  %133 = vmatprep.subr.mxu0 0.0
  %134 = vmatpush1.xpose.msra.mxu0 0.0
  %135 = vmatprep.subr.mxu0 0.0
  %136 = vmatpush1.xpose.msra.mxu0 0.0
  %137 = vmatprep.subr.mxu0 0.0
  %138 = vmatpush1.xpose.msra.mxu0 0.0
  %139 = vmatprep.subr.mxu0 0.0
  %140 = vmatpush1.xpose.msra.mxu0 0.0
  %141 = vmatprep.mubr.f32.mxu0 %v20
  %142 = vmatmul.mubr.f32.gmra.mrb[0].mxu0 %v19
  %v143 = vpop.f32.mrb[0].mxu0
  %v144 = vadd.f32 %v31, %v143
  %v145 = vpop.f32.mrb[0].mxu0
  %146 = vdwg.mxu0
  %147 = vmatprep.subr.mxu0 %v51
  %148 = vmatpush1.xpose.msra.mxu0 %v49
  %149 = vmatprep.subr.mxu0 0.0
  %150 = vmatpush1.xpose.msra.mxu0 0.0
  %151 = vmatprep.subr.mxu0 0.0
  %152 = vmatpush1.xpose.msra.mxu0 0.0
  %153 = vmatprep.subr.mxu0 0.0
  %154 = vmatpush1.xpose.msra.mxu0 0.0
  %155 = vmatprep.subr.mxu0 0.0
  %156 = vmatpush1.xpose.msra.mxu0 0.0
  %157 = vmatprep.subr.mxu0 0.0
  %158 = vmatpush1.xpose.msra.mxu0 0.0
  %159 = vmatprep.subr.mxu0 0.0
  %160 = vmatpush1.xpose.msra.mxu0 0.0
  %161 = vmatprep.subr.mxu0 0.0
  %162 = vmatpush1.xpose.msra.mxu0 0.0
  %163 = vmatprep.subr.mxu0 0.0
  %164 = vmatpush1.xpose.msra.mxu0 0.0
  %165 = vmatprep.subr.mxu0 0.0
  %166 = vmatpush1.xpose.msra.mxu0 0.0
  %167 = vmatprep.subr.mxu0 0.0
  %168 = vmatpush1.xpose.msra.mxu0 0.0
  %169 = vmatprep.subr.mxu0 0.0
  %170 = vmatpush1.xpose.msra.mxu0 0.0
  %171 = vmatprep.subr.mxu0 0.0
  %172 = vmatpush1.xpose.msra.mxu0 0.0
  %173 = vmatprep.subr.mxu0 0.0
  %174 = vmatpush1.xpose.msra.mxu0 0.0
  %175 = vmatprep.subr.mxu0 0.0
  %176 = vmatpush1.xpose.msra.mxu0 0.0
  %177 = vmatprep.subr.mxu0 0.0
  %178 = vmatpush1.xpose.msra.mxu0 0.0
  %179 = vmatprep.subr.mxu0 0.0
  %180 = vmatpush1.xpose.msra.mxu0 0.0
  %181 = vmatprep.subr.mxu0 0.0
  %182 = vmatpush1.xpose.msra.mxu0 0.0
  %183 = vmatprep.subr.mxu0 0.0
  %184 = vmatpush1.xpose.msra.mxu0 0.0
  %185 = vmatprep.subr.mxu0 0.0
  %186 = vmatpush1.xpose.msra.mxu0 0.0
  %187 = vmatprep.subr.mxu0 0.0
  %188 = vmatpush1.xpose.msra.mxu0 0.0
  %189 = vmatprep.subr.mxu0 0.0
  %190 = vmatpush1.xpose.msra.mxu0 0.0
  %191 = vmatprep.subr.mxu0 0.0
  %192 = vmatpush1.xpose.msra.mxu0 0.0
  %193 = vmatprep.subr.mxu0 0.0
  %194 = vmatpush1.xpose.msra.mxu0 0.0
  %195 = vmatprep.subr.mxu0 0.0
  %196 = vmatpush1.xpose.msra.mxu0 0.0
  %197 = vmatprep.subr.mxu0 0.0
  %198 = vmatpush1.xpose.msra.mxu0 0.0
  %199 = vmatprep.subr.mxu0 0.0
  %200 = vmatpush1.xpose.msra.mxu0 0.0
  %201 = vmatprep.subr.mxu0 0.0
  %202 = vmatpush1.xpose.msra.mxu0 0.0
  %203 = vmatprep.subr.mxu0 0.0
  %204 = vmatpush1.xpose.msra.mxu0 0.0
  %205 = vmatprep.subr.mxu0 0.0
  %206 = vmatpush1.xpose.msra.mxu0 0.0
  %207 = vmatprep.subr.mxu0 0.0
  %208 = vmatpush1.xpose.msra.mxu0 0.0
  %209 = vmatprep.subr.mxu0 0.0
  %210 = vmatpush1.xpose.msra.mxu0 0.0
  %211 = vmatprep.mubr.f32.mxu0 %v22
  %212 = vmatmul.mubr.f32.gmra.mrb[0].mxu0 %v21
  %v213 = vpop.f32.mrb[0].mxu0
  %v214 = vadd.f32 %v144, %v213
  %v215 = vpop.f32.mrb[0].mxu0
  %216 = vdwg.mxu0
  %217 = vmatprep.subr.mxu0 %v67
  %218 = vmatpush1.xpose.msra.mxu0 %v59
  %219 = vmatprep.subr.mxu0 0.0
  %220 = vmatpush1.xpose.msra.mxu0 0.0
  %221 = vmatprep.subr.mxu0 0.0
  %222 = vmatpush1.xpose.msra.mxu0 0.0
  %223 = vmatprep.subr.mxu0 0.0
  %224 = vmatpush1.xpose.msra.mxu0 0.0
  %225 = vmatprep.subr.mxu0 0.0
  %226 = vmatpush1.xpose.msra.mxu0 0.0
  %227 = vmatprep.subr.mxu0 0.0
  %228 = vmatpush1.xpose.msra.mxu0 0.0
  %229 = vmatprep.subr.mxu0 0.0
  %230 = vmatpush1.xpose.msra.mxu0 0.0
  %231 = vmatprep.subr.mxu0 0.0
  %232 = vmatpush1.xpose.msra.mxu0 0.0
  %233 = vmatprep.subr.mxu0 0.0
  %234 = vmatpush1.xpose.msra.mxu0 0.0
  %235 = vmatprep.subr.mxu0 0.0
  %236 = vmatpush1.xpose.msra.mxu0 0.0
  %237 = vmatprep.subr.mxu0 0.0
  %238 = vmatpush1.xpose.msra.mxu0 0.0
  %239 = vmatprep.subr.mxu0 0.0
  %240 = vmatpush1.xpose.msra.mxu0 0.0
  %241 = vmatprep.subr.mxu0 0.0
  %242 = vmatpush1.xpose.msra.mxu0 0.0
  %243 = vmatprep.subr.mxu0 0.0
  %244 = vmatpush1.xpose.msra.mxu0 0.0
  %245 = vmatprep.subr.mxu0 0.0
  %246 = vmatpush1.xpose.msra.mxu0 0.0
  %247 = vmatprep.subr.mxu0 0.0
  %248 = vmatpush1.xpose.msra.mxu0 0.0
  %249 = vmatprep.subr.mxu0 0.0
  %250 = vmatpush1.xpose.msra.mxu0 0.0
  %251 = vmatprep.subr.mxu0 0.0
  %252 = vmatpush1.xpose.msra.mxu0 0.0
  %253 = vmatprep.subr.mxu0 0.0
  %254 = vmatpush1.xpose.msra.mxu0 0.0
  %255 = vmatprep.subr.mxu0 0.0
  %256 = vmatpush1.xpose.msra.mxu0 0.0
  %257 = vmatprep.subr.mxu0 0.0
  %258 = vmatpush1.xpose.msra.mxu0 0.0
  %259 = vmatprep.subr.mxu0 0.0
  %260 = vmatpush1.xpose.msra.mxu0 0.0
  %261 = vmatprep.subr.mxu0 0.0
  %262 = vmatpush1.xpose.msra.mxu0 0.0
  %263 = vmatprep.subr.mxu0 0.0
  %264 = vmatpush1.xpose.msra.mxu0 0.0
  %265 = vmatprep.subr.mxu0 0.0
  %266 = vmatpush1.xpose.msra.mxu0 0.0
  %267 = vmatprep.subr.mxu0 0.0
  %268 = vmatpush1.xpose.msra.mxu0 0.0
  %269 = vmatprep.subr.mxu0 0.0
  %270 = vmatpush1.xpose.msra.mxu0 0.0
  %271 = vmatprep.subr.mxu0 0.0
  %272 = vmatpush1.xpose.msra.mxu0 0.0
  %273 = vmatprep.subr.mxu0 0.0
  %274 = vmatpush1.xpose.msra.mxu0 0.0
  %275 = vmatprep.subr.mxu0 0.0
  %276 = vmatpush1.xpose.msra.mxu0 0.0
  %277 = vmatprep.subr.mxu0 0.0
  %278 = vmatpush1.xpose.msra.mxu0 0.0
  %279 = vmatprep.subr.mxu0 0.0
  %280 = vmatpush1.xpose.msra.mxu0 0.0
  %281 = vmatprep.mubr.f32.mxu0 %v24
  %282 = vmatmul.mubr.f32.gmra.mrb[0].mxu0 %v23
  %v283 = vpop.f32.mrb[0].mxu0
  %v284 = vadd.f32 %v214, %v283
  %v285 = vpop.f32.mrb[0].mxu0
  %286 = vdwg.mxu0
  %287 = vmatprep.subr.mxu0 %v68
  %288 = vmatpush1.xpose.msra.mxu0 %v66
  %289 = vmatprep.subr.mxu0 0.0
  %290 = vmatpush1.xpose.msra.mxu0 0.0
  %291 = vmatprep.subr.mxu0 0.0
  %292 = vmatpush1.xpose.msra.mxu0 0.0
  %293 = vmatprep.subr.mxu0 0.0
  %294 = vmatpush1.xpose.msra.mxu0 0.0
  %295 = vmatprep.subr.mxu0 0.0
  %296 = vmatpush1.xpose.msra.mxu0 0.0
  %297 = vmatprep.subr.mxu0 0.0
  %298 = vmatpush1.xpose.msra.mxu0 0.0
  %299 = vmatprep.subr.mxu0 0.0
  %300 = vmatpush1.xpose.msra.mxu0 0.0
  %301 = vmatprep.subr.mxu0 0.0
  %302 = vmatpush1.xpose.msra.mxu0 0.0
  %303 = vmatprep.subr.mxu0 0.0
  %304 = vmatpush1.xpose.msra.mxu0 0.0
  %305 = vmatprep.subr.mxu0 0.0
  %306 = vmatpush1.xpose.msra.mxu0 0.0
  %307 = vmatprep.subr.mxu0 0.0
  %308 = vmatpush1.xpose.msra.mxu0 0.0
  %309 = vmatprep.subr.mxu0 0.0
  %310 = vmatpush1.xpose.msra.mxu0 0.0
  %311 = vmatprep.subr.mxu0 0.0
  %312 = vmatpush1.xpose.msra.mxu0 0.0
  %313 = vmatprep.subr.mxu0 0.0
  %314 = vmatpush1.xpose.msra.mxu0 0.0
  %315 = vmatprep.subr.mxu0 0.0
  %316 = vmatpush1.xpose.msra.mxu0 0.0
  %317 = vmatprep.subr.mxu0 0.0
  %318 = vmatpush1.xpose.msra.mxu0 0.0
  %319 = vmatprep.subr.mxu0 0.0
  %320 = vmatpush1.xpose.msra.mxu0 0.0
  %321 = vmatprep.subr.mxu0 0.0
  %322 = vmatpush1.xpose.msra.mxu0 0.0
  %323 = vmatprep.subr.mxu0 0.0
  %324 = vmatpush1.xpose.msra.mxu0 0.0
  %325 = vmatprep.subr.mxu0 0.0
  %326 = vmatpush1.xpose.msra.mxu0 0.0
  %327 = vmatprep.subr.mxu0 0.0
  %328 = vmatpush1.xpose.msra.mxu0 0.0
  %329 = vmatprep.subr.mxu0 0.0
  %330 = vmatpush1.xpose.msra.mxu0 0.0
  %331 = vmatprep.subr.mxu0 0.0
  %332 = vmatpush1.xpose.msra.mxu0 0.0
  %333 = vmatprep.subr.mxu0 0.0
  %334 = vmatpush1.xpose.msra.mxu0 0.0
  %335 = vmatprep.subr.mxu0 0.0
  %336 = vmatpush1.xpose.msra.mxu0 0.0
  %337 = vmatprep.subr.mxu0 0.0
  %338 = vmatpush1.xpose.msra.mxu0 0.0
  %339 = vmatprep.subr.mxu0 0.0
  %340 = vmatpush1.xpose.msra.mxu0 0.0
  %341 = vmatprep.subr.mxu0 0.0
  %342 = vmatpush1.xpose.msra.mxu0 0.0
  %343 = vmatprep.subr.mxu0 0.0
  %344 = vmatpush1.xpose.msra.mxu0 0.0
  %345 = vmatprep.subr.mxu0 0.0
  %346 = vmatpush1.xpose.msra.mxu0 0.0
  %347 = vmatprep.subr.mxu0 0.0
  %348 = vmatpush1.xpose.msra.mxu0 0.0
  %349 = vmatprep.subr.mxu0 0.0
  %350 = vmatpush1.xpose.msra.mxu0 0.0
  %351 = vmatprep.mubr.f32.mxu0 %v26
  %352 = vmatmul.mubr.f32.gmra.mrb[0].mxu0 %v25
  %v353 = vpop.f32.mrb[0].mxu0
  %v354 = vadd.f32 %v284, %v353
  %v355 = vpop.f32.mrb[0].mxu0
  %356 = vdwg.mxu0
  %vm357 = vcmask 15360
  %v358 = vsel %vm357, %v354, -inf
  %v359 = vrot.slane %v358, 4
  %v360 = vmax.f32 %v358, %v359
  %v361 = vrot.slane %v360, 2
  %v362 = vmax.f32 %v360, %v361
  %v363 = vrot.slane %v362, 1
  %v364 = vmax.f32 %v362, %v363
  %v365 = vsub.f32 %v354, %v364
  %v366 = vmul.f32 %v365, 1.442695
  %v367 = vpow.pop %v366
  %v368 = vsel %vm357, %v367, 0.0
  %v369 = vrot.slane %v368, 4
  %v370 = vadd.f32 %v368, %v369
  %v371 = vrot.slane %v370, 2
  %v372 = vadd.f32 %v370, %v371
  %v373 = vrot.slane %v372, 1
  %v374 = vadd.f32 %v372, %v373
  %v375 = vlog2.pop %v374
  %v376 = vmul.f32 %v375, 0.6931472
  %v377 = vsub.f32 %v365, %v376
  %v378 = vrcp.pop %v374
  %v379 = vmul.f32 %v367, %v378
  %v380 = vmul.f32 %v379, %v377
  %v381 = vsel %vm357, %v380, 0.0
  %v382 = vrot.slane %v381, 4
  %v383 = vadd.f32 %v381, %v382
  %v384 = vrot.slane %v383, 2
  %v385 = vadd.f32 %v383, %v384
  %v386 = vrot.slane %v385, 1
  %v387 = vadd.f32 %v385, %v386
  %v388 = vsub.f32 0.0, %v387
  %v389 = vadd.f32 %v377, %v388
  %v390 = vmul.f32 %v379, %v389
  %v391 = vsub.f32 0.0, %v390
  %v392 = vmul.f32 %v391, 0.5
  %v394 = vsel %vm357, %v392, 0
  %vm396 = vcmask 1041408
  %v397 = vsel %vm396, %v42, 0
  %v399 = vsel %vm396, %v50, 0
  %v401 = vsel %vm396, %v49, 0
  %v403 = vsel %vm396, %v51, 0
  %v405 = vsel %vm396, %v59, 0
  %v407 = vsel %vm396, %v67, 0
  %v409 = vsel %vm396, %v66, 0
  %v411 = vsel %vm396, %v68, 0
  %413 = vmatprep.subr.mxu0 %v399
  %414 = vmatpush1.msra.mxu0 %v397
  %415 = vmatprep.subr.mxu0 0.0
  %416 = vmatpush1.msra.mxu0 0.0
  %417 = vmatprep.subr.mxu0 0.0
  %418 = vmatpush1.msra.mxu0 0.0
  %419 = vmatprep.subr.mxu0 0.0
  %420 = vmatpush1.msra.mxu0 0.0
  %421 = vmatprep.subr.mxu0 0.0
  %422 = vmatpush1.msra.mxu0 0.0
  %423 = vmatprep.subr.mxu0 0.0
  %424 = vmatpush1.msra.mxu0 0.0
  %425 = vmatprep.subr.mxu0 0.0
  %426 = vmatpush1.msra.mxu0 0.0
  %427 = vmatprep.subr.mxu0 0.0
  %428 = vmatpush1.msra.mxu0 0.0
  %429 = vmatprep.subr.mxu0 0.0
  %430 = vmatpush1.msra.mxu0 0.0
  %431 = vmatprep.subr.mxu0 0.0
  %432 = vmatpush1.msra.mxu0 0.0
  %433 = vmatprep.subr.mxu0 0.0
  %434 = vmatpush1.msra.mxu0 0.0
  %435 = vmatprep.subr.mxu0 0.0
  %436 = vmatpush1.msra.mxu0 0.0
  %437 = vmatprep.subr.mxu0 0.0
  %438 = vmatpush1.msra.mxu0 0.0
  %439 = vmatprep.subr.mxu0 0.0
  %440 = vmatpush1.msra.mxu0 0.0
  %441 = vmatprep.subr.mxu0 0.0
  %442 = vmatpush1.msra.mxu0 0.0
  %443 = vmatprep.subr.mxu0 0.0
  %444 = vmatpush1.msra.mxu0 0.0
  %445 = vmatprep.subr.mxu0 0.0
  %446 = vmatpush1.msra.mxu0 0.0
  %447 = vmatprep.subr.mxu0 0.0
  %448 = vmatpush1.msra.mxu0 0.0
  %449 = vmatprep.subr.mxu0 0.0
  %450 = vmatpush1.msra.mxu0 0.0
  %451 = vmatprep.subr.mxu0 0.0
  %452 = vmatpush1.msra.mxu0 0.0
  %453 = vmatprep.subr.mxu0 0.0
  %454 = vmatpush1.msra.mxu0 0.0
  %455 = vmatprep.subr.mxu0 0.0
  %456 = vmatpush1.msra.mxu0 0.0
  %457 = vmatprep.subr.mxu0 0.0
  %458 = vmatpush1.msra.mxu0 0.0
  %459 = vmatprep.subr.mxu0 0.0
  %460 = vmatpush1.msra.mxu0 0.0
  %461 = vmatprep.subr.mxu0 0.0
  %462 = vmatpush1.msra.mxu0 0.0
  %463 = vmatprep.subr.mxu0 0.0
  %464 = vmatpush1.msra.mxu0 0.0
  %465 = vmatprep.subr.mxu0 0.0
  %466 = vmatpush1.msra.mxu0 0.0
  %467 = vmatprep.subr.mxu0 0.0
  %468 = vmatpush1.msra.mxu0 0.0
  %469 = vmatprep.subr.mxu0 0.0
  %470 = vmatpush1.msra.mxu0 0.0
  %471 = vmatprep.subr.mxu0 0.0
  %472 = vmatpush1.msra.mxu0 0.0
  %473 = vmatprep.subr.mxu0 0.0
  %474 = vmatpush1.msra.mxu0 0.0
  %475 = vmatprep.subr.mxu0 0.0
  %476 = vmatpush1.msra.mxu0 0.0
  %477 = vmatprep.mubr.f32.mxu0 0.0
  %478 = vmatmul.mubr.f32.gmra.mrb[0].mxu0 %v394
  %v479 = vpop.f32.mrb[0].mxu0
  %v480 = vadd.f32 0.0, %v479
  %v481 = vpop.f32.mrb[0].mxu0
  %v482 = vadd.f32 0.0, %v481
  %483 = vdwg.mxu0
  %484 = vmatprep.subr.mxu0 %v403
  %485 = vmatpush1.msra.mxu0 %v401
  %486 = vmatprep.subr.mxu0 0.0
  %487 = vmatpush1.msra.mxu0 0.0
  %488 = vmatprep.subr.mxu0 0.0
  %489 = vmatpush1.msra.mxu0 0.0
  %490 = vmatprep.subr.mxu0 0.0
  %491 = vmatpush1.msra.mxu0 0.0
  %492 = vmatprep.subr.mxu0 0.0
  %493 = vmatpush1.msra.mxu0 0.0
  %494 = vmatprep.subr.mxu0 0.0
  %495 = vmatpush1.msra.mxu0 0.0
  %496 = vmatprep.subr.mxu0 0.0
  %497 = vmatpush1.msra.mxu0 0.0
  %498 = vmatprep.subr.mxu0 0.0
  %499 = vmatpush1.msra.mxu0 0.0
  %500 = vmatprep.subr.mxu0 0.0
  %501 = vmatpush1.msra.mxu0 0.0
  %502 = vmatprep.subr.mxu0 0.0
  %503 = vmatpush1.msra.mxu0 0.0
  %504 = vmatprep.subr.mxu0 0.0
  %505 = vmatpush1.msra.mxu0 0.0
  %506 = vmatprep.subr.mxu0 0.0
  %507 = vmatpush1.msra.mxu0 0.0
  %508 = vmatprep.subr.mxu0 0.0
  %509 = vmatpush1.msra.mxu0 0.0
  %510 = vmatprep.subr.mxu0 0.0
  %511 = vmatpush1.msra.mxu0 0.0
  %512 = vmatprep.subr.mxu0 0.0
  %513 = vmatpush1.msra.mxu0 0.0
  %514 = vmatprep.subr.mxu0 0.0
  %515 = vmatpush1.msra.mxu0 0.0
  %516 = vmatprep.subr.mxu0 0.0
  %517 = vmatpush1.msra.mxu0 0.0
  %518 = vmatprep.subr.mxu0 0.0
  %519 = vmatpush1.msra.mxu0 0.0
  %520 = vmatprep.subr.mxu0 0.0
  %521 = vmatpush1.msra.mxu0 0.0
  %522 = vmatprep.subr.mxu0 0.0
  %523 = vmatpush1.msra.mxu0 0.0
  %524 = vmatprep.subr.mxu0 0.0
  %525 = vmatpush1.msra.mxu0 0.0
  %526 = vmatprep.subr.mxu0 0.0
  %527 = vmatpush1.msra.mxu0 0.0
  %528 = vmatprep.subr.mxu0 0.0
  %529 = vmatpush1.msra.mxu0 0.0
  %530 = vmatprep.subr.mxu0 0.0
  %531 = vmatpush1.msra.mxu0 0.0
  %532 = vmatprep.subr.mxu0 0.0
  %533 = vmatpush1.msra.mxu0 0.0
  %534 = vmatprep.subr.mxu0 0.0
  %535 = vmatpush1.msra.mxu0 0.0
  %536 = vmatprep.subr.mxu0 0.0
  %537 = vmatpush1.msra.mxu0 0.0
  %538 = vmatprep.subr.mxu0 0.0
  %539 = vmatpush1.msra.mxu0 0.0
  %540 = vmatprep.subr.mxu0 0.0
  %541 = vmatpush1.msra.mxu0 0.0
  %542 = vmatprep.subr.mxu0 0.0
  %543 = vmatpush1.msra.mxu0 0.0
  %544 = vmatprep.subr.mxu0 0.0
  %545 = vmatpush1.msra.mxu0 0.0
  %546 = vmatprep.subr.mxu0 0.0
  %547 = vmatpush1.msra.mxu0 0.0
  %548 = vmatprep.mubr.f32.mxu0 0.0
  %549 = vmatmul.mubr.f32.gmra.mrb[0].mxu0 %v394
  %v550 = vpop.f32.mrb[0].mxu0
  %v551 = vadd.f32 0.0, %v550
  %v552 = vpop.f32.mrb[0].mxu0
  %v553 = vadd.f32 0.0, %v552
  %554 = vdwg.mxu0
  %555 = vmatprep.subr.mxu0 %v407
  %556 = vmatpush1.msra.mxu0 %v405
  %557 = vmatprep.subr.mxu0 0.0
  %558 = vmatpush1.msra.mxu0 0.0
  %559 = vmatprep.subr.mxu0 0.0
  %560 = vmatpush1.msra.mxu0 0.0
  %561 = vmatprep.subr.mxu0 0.0
  %562 = vmatpush1.msra.mxu0 0.0
  %563 = vmatprep.subr.mxu0 0.0
  %564 = vmatpush1.msra.mxu0 0.0
  %565 = vmatprep.subr.mxu0 0.0
  %566 = vmatpush1.msra.mxu0 0.0
  %567 = vmatprep.subr.mxu0 0.0
  %568 = vmatpush1.msra.mxu0 0.0
  %569 = vmatprep.subr.mxu0 0.0
  %570 = vmatpush1.msra.mxu0 0.0
  %571 = vmatprep.subr.mxu0 0.0
  %572 = vmatpush1.msra.mxu0 0.0
  %573 = vmatprep.subr.mxu0 0.0
  %574 = vmatpush1.msra.mxu0 0.0
  %575 = vmatprep.subr.mxu0 0.0
  %576 = vmatpush1.msra.mxu0 0.0
  %577 = vmatprep.subr.mxu0 0.0
  %578 = vmatpush1.msra.mxu0 0.0
  %579 = vmatprep.subr.mxu0 0.0
  %580 = vmatpush1.msra.mxu0 0.0
  %581 = vmatprep.subr.mxu0 0.0
  %582 = vmatpush1.msra.mxu0 0.0
  %583 = vmatprep.subr.mxu0 0.0
  %584 = vmatpush1.msra.mxu0 0.0
  %585 = vmatprep.subr.mxu0 0.0
  %586 = vmatpush1.msra.mxu0 0.0
  %587 = vmatprep.subr.mxu0 0.0
  %588 = vmatpush1.msra.mxu0 0.0
  %589 = vmatprep.subr.mxu0 0.0
  %590 = vmatpush1.msra.mxu0 0.0
  %591 = vmatprep.subr.mxu0 0.0
  %592 = vmatpush1.msra.mxu0 0.0
  %593 = vmatprep.subr.mxu0 0.0
  %594 = vmatpush1.msra.mxu0 0.0
  %595 = vmatprep.subr.mxu0 0.0
  %596 = vmatpush1.msra.mxu0 0.0
  %597 = vmatprep.subr.mxu0 0.0
  %598 = vmatpush1.msra.mxu0 0.0
  %599 = vmatprep.subr.mxu0 0.0
  %600 = vmatpush1.msra.mxu0 0.0
  %601 = vmatprep.subr.mxu0 0.0
  %602 = vmatpush1.msra.mxu0 0.0
  %603 = vmatprep.subr.mxu0 0.0
  %604 = vmatpush1.msra.mxu0 0.0
  %605 = vmatprep.subr.mxu0 0.0
  %606 = vmatpush1.msra.mxu0 0.0
  %607 = vmatprep.subr.mxu0 0.0
  %608 = vmatpush1.msra.mxu0 0.0
  %609 = vmatprep.subr.mxu0 0.0
  %610 = vmatpush1.msra.mxu0 0.0
  %611 = vmatprep.subr.mxu0 0.0
  %612 = vmatpush1.msra.mxu0 0.0
  %613 = vmatprep.subr.mxu0 0.0
  %614 = vmatpush1.msra.mxu0 0.0
  %615 = vmatprep.subr.mxu0 0.0
  %616 = vmatpush1.msra.mxu0 0.0
  %617 = vmatprep.subr.mxu0 0.0
  %618 = vmatpush1.msra.mxu0 0.0
  %619 = vmatprep.mubr.f32.mxu0 0.0
  %620 = vmatmul.mubr.f32.gmra.mrb[0].mxu0 %v394
  %v621 = vpop.f32.mrb[0].mxu0
  %v622 = vadd.f32 0.0, %v621
  %v623 = vpop.f32.mrb[0].mxu0
  %v624 = vadd.f32 0.0, %v623
  %625 = vdwg.mxu0
  %626 = vmatprep.subr.mxu0 %v411
  %627 = vmatpush1.msra.mxu0 %v409
  %628 = vmatprep.subr.mxu0 0.0
  %629 = vmatpush1.msra.mxu0 0.0
  %630 = vmatprep.subr.mxu0 0.0
  %631 = vmatpush1.msra.mxu0 0.0
  %632 = vmatprep.subr.mxu0 0.0
  %633 = vmatpush1.msra.mxu0 0.0
  %634 = vmatprep.subr.mxu0 0.0
  %635 = vmatpush1.msra.mxu0 0.0
  %636 = vmatprep.subr.mxu0 0.0
  %637 = vmatpush1.msra.mxu0 0.0
  %638 = vmatprep.subr.mxu0 0.0
  %639 = vmatpush1.msra.mxu0 0.0
  %640 = vmatprep.subr.mxu0 0.0
  %641 = vmatpush1.msra.mxu0 0.0
  %642 = vmatprep.subr.mxu0 0.0
  %643 = vmatpush1.msra.mxu0 0.0
  %644 = vmatprep.subr.mxu0 0.0
  %645 = vmatpush1.msra.mxu0 0.0
  %646 = vmatprep.subr.mxu0 0.0
  %647 = vmatpush1.msra.mxu0 0.0
  %648 = vmatprep.subr.mxu0 0.0
  %649 = vmatpush1.msra.mxu0 0.0
  %650 = vmatprep.subr.mxu0 0.0
  %651 = vmatpush1.msra.mxu0 0.0
  %652 = vmatprep.subr.mxu0 0.0
  %653 = vmatpush1.msra.mxu0 0.0
  %654 = vmatprep.subr.mxu0 0.0
  %655 = vmatpush1.msra.mxu0 0.0
  %656 = vmatprep.subr.mxu0 0.0
  %657 = vmatpush1.msra.mxu0 0.0
  %658 = vmatprep.subr.mxu0 0.0
  %659 = vmatpush1.msra.mxu0 0.0
  %660 = vmatprep.subr.mxu0 0.0
  %661 = vmatpush1.msra.mxu0 0.0
  %662 = vmatprep.subr.mxu0 0.0
  %663 = vmatpush1.msra.mxu0 0.0
  %664 = vmatprep.subr.mxu0 0.0
  %665 = vmatpush1.msra.mxu0 0.0
  %666 = vmatprep.subr.mxu0 0.0
  %667 = vmatpush1.msra.mxu0 0.0
  %668 = vmatprep.subr.mxu0 0.0
  %669 = vmatpush1.msra.mxu0 0.0
  %670 = vmatprep.subr.mxu0 0.0
  %671 = vmatpush1.msra.mxu0 0.0
  %672 = vmatprep.subr.mxu0 0.0
  %673 = vmatpush1.msra.mxu0 0.0
  %674 = vmatprep.subr.mxu0 0.0
  %675 = vmatpush1.msra.mxu0 0.0
  %676 = vmatprep.subr.mxu0 0.0
  %677 = vmatpush1.msra.mxu0 0.0
  %678 = vmatprep.subr.mxu0 0.0
  %679 = vmatpush1.msra.mxu0 0.0
  %680 = vmatprep.subr.mxu0 0.0
  %681 = vmatpush1.msra.mxu0 0.0
  %682 = vmatprep.subr.mxu0 0.0
  %683 = vmatpush1.msra.mxu0 0.0
  %684 = vmatprep.subr.mxu0 0.0
  %685 = vmatpush1.msra.mxu0 0.0
  %686 = vmatprep.subr.mxu0 0.0
  %687 = vmatpush1.msra.mxu0 0.0
  %688 = vmatprep.subr.mxu0 0.0
  %689 = vmatpush1.msra.mxu0 0.0
  %690 = vmatprep.mubr.f32.mxu0 0.0
  %691 = vmatmul.mubr.f32.gmra.mrb[0].mxu0 %v394
  %v692 = vpop.f32.mrb[0].mxu0
  %v693 = vadd.f32 0.0, %v692
  %v694 = vpop.f32.mrb[0].mxu0
  %v695 = vadd.f32 0.0, %v694
  %696 = vdwg.mxu0
  %v697 = vsel %vm357, %v392, 0.0
  %698 = vadd.xlane.f32.xlu0 %v697
  %v699 = vpop.xlane.xlu0 %698
  %v700 = vmul.f32 %v480, 0.001
  %v701 = vmul.f32 %v482, 0.001
  %v702 = vmul.f32 %v551, 0.001
  %v703 = vmul.f32 %v553, 0.001
  %v704 = vmul.f32 %v622, 0.001
  %v705 = vmul.f32 %v624, 0.001
  %v706 = vmul.f32 %v693, 0.001
  %v707 = vmul.f32 %v695, 0.001
  %v708 = vsub.f32 %v19, %v700
  %v709 = vsub.f32 %v20, %v701
  %v710 = vsub.f32 %v21, %v702
  %v711 = vsub.f32 %v22, %v703
  %v712 = vsub.f32 %v23, %v704
  %v713 = vsub.f32 %v24, %v705
  %v714 = vsub.f32 %v25, %v706
  %v715 = vsub.f32 %v26, %v707
  %v716 = vmul.f32 %v699, 0.001
  %v717 = vsub.f32 %v27, %v716
  %718 = vst.msk [vmem:[%s3] sm:$0xff] %vm357, %v354
  %719 = vst [vmem:[%s4] sm:$0xff] %v708
  %720 = vst [vmem:[%s4 + $0x8] sm:$0xff] %v709
  %721 = vst [vmem:[%s4 + $0x10] sm:$0xff] %v710
  %722 = vst [vmem:[%s4 + $0x18] sm:$0xff] %v711
  %723 = vst [vmem:[%s4 + $0x20] sm:$0xff] %v712
  %724 = vst [vmem:[%s4 + $0x28] sm:$0xff] %v713
  %725 = vst [vmem:[%s4 + $0x30] sm:$0xff] %v714
  %726 = vst [vmem:[%s4 + $0x38] sm:$0xff] %v715
  %vm727 = vcmask 7168
  %728 = vst.msk [vmem:[%s5] sm:$0xff] %vm727, %v717
  // Predicated region
  $region14: #{tpu_custom_call.1} parent=0 // pred_check
    _
  $region15: #{tpu_custom_call.1} parent=0 // pred_check_branch
    %730 = sbr.rel (0) target = $region17
  $region16: #{tpu_custom_call.1} parent=0 // pred_region
    _
  $region17: #{tpu_custom_call.1} parent=0 // pred_fallthru
    _
  // Predicated region
  $region18: #{tpu_custom_call.1} parent=0 // pred_check
    _
  $region19: #{tpu_custom_call.1} parent=0 // pred_check_branch
    %732 = sbr.rel (0) target = $region21
  $region20: #{tpu_custom_call.1} parent=0 // pred_region
    _
  $region21: #{tpu_custom_call.1} parent=0 // pred_fallthru
    _
  // Predicated region
  $region22: #{tpu_custom_call.1} parent=0 // pred_check
    _
  $region23: #{tpu_custom_call.1} parent=0 // pred_check_branch
    %734 = sbr.rel (0) target = $region25
  $region24: #{tpu_custom_call.1} parent=0 // pred_region
    _
  $region25: #{tpu_custom_call.1} parent=0 // pred_fallthru
    _
  // Predicated region
  $region26: #{tpu_custom_call.1} parent=0 // pred_check
    _
  $region27: #{tpu_custom_call.1} parent=0 // pred_check_branch
    %736 = sbr.rel (0) target = $region29
  $region28: #{tpu_custom_call.1} parent=0 // pred_region
    _
  $region29: #{tpu_custom_call.1} parent=0 // pred_fallthru
    _
  // Predicated region
  $region30: #{tpu_custom_call.1} parent=0 // pred_check
    _
  $region31: #{tpu_custom_call.1} parent=0 // pred_check_branch
    %738 = sbr.rel (0) target = $region33
  $region32: #{tpu_custom_call.1} parent=0 // pred_region
    _
  $region33: #{tpu_custom_call.1} parent=0 // pred_fallthru
    _
  // Predicated region
  $region34: #{tpu_custom_call.1} parent=0 // pred_check
    _
  $region35: #{tpu_custom_call.1} parent=0 // pred_check_branch
    %740 = sbr.rel (0) target = $region37
  $region36: #{tpu_custom_call.1} parent=0 // pred_region
    _
  $region37: #{tpu_custom_call.1} parent=0 // pred_fallthru
    _

</llo_original>
